<compile_context>
chip_gen: v7x
topology: tpu7x:2x2x1
jax: 0.10.0
libtpu: 0.0.40
codegen_flags: <defaults>
</compile_context>

<pallas_src>
import numpy as np
import jax
import jax.numpy as jnp
from jax.experimental import pallas as pl
from jax.experimental.pallas import tpu as pltpu


def _adaptive_spectral_kernel(x_ref, cf_ref, sf_ref, wsym_ref, w4_ref,
                              sel_ref, selt_ref, thr_ref, o_ref):
    # x_ref   : (N, Bt*C)  compute dtype (bf16 or f32) — lane-dense slab
    # cf/sf   : (F, N)     compute dtype — real/imag ortho rfft matrices
    # wsym    : (F, 1)     f32 — conjugate-symmetry weights (1, 2, ..., 2, [1])
    # w4      : (4, Bt*C)  f32 — [wh_re, wh_im, wl_re, wl_im] tiled per batch
    # sel     : (Bt*C, Bt) f32 — block-diagonal channel->batch selector
    # selt    : (Bt, Bt*C) f32 — its transpose (mask broadcast helper)
    # thr     : (1,)       f32 in SMEM
    # o_ref   : (N, Bt*C)  output dtype
    xc = x_ref[...]
    cf = cf_ref[...]
    sf = sf_ref[...]

    # ---- rfft (ortho) as MXU matmuls, f32 accumulation --------------------
    xr = jnp.dot(cf, xc, preferred_element_type=jnp.float32)      # (F, BtC)
    xi = jnp.dot(sf, xc, preferred_element_type=jnp.float32)      # (F, BtC)

    # ---- adaptive low-frequency mask (strictly f32, computed once) --------
    power = xr * xr + xi * xi                                      # (F, BtC)
    # per-batch channel-energy reduction on the MXU (selector matmul)
    energy = jnp.dot(power, sel_ref[...],
                     preferred_element_type=jnp.float32)           # (F, Bt)

    f_bins, bt = energy.shape
    kth = (f_bins - 1) // 2                                        # lower median
    ones_row = jnp.ones((1, f_bins), jnp.float32)
    thr = thr_ref[0]

    mask_full = None                                               # (F, BtC)
    for b in range(bt):                                            # Bt is small & static
        e_col = energy[:, b:b + 1]                                 # (F, 1)
        e_row = jnp.transpose(e_col)                               # (1, F)
        less = (e_col < e_row).astype(jnp.float32)                 # (F, F)
        eq = (e_col == e_row).astype(jnp.float32)
        # rank counts via ones-vector matmuls (MXU) instead of sublane sums
        cnt_less = jnp.dot(ones_row, less, preferred_element_type=jnp.float32)
        cnt_eq = jnp.dot(ones_row, eq, preferred_element_type=jnp.float32)
        is_med = jnp.logical_and(cnt_less <= kth, kth < cnt_less + cnt_eq)
        med_b = jnp.max(jnp.where(is_med, e_row, jnp.float32(-1.0)),
                        axis=1, keepdims=True)                     # (1, 1)
        norm_b = e_col / (med_b + jnp.float32(1e-6))               # (F, 1)
        mask_b = (norm_b < thr).astype(jnp.float32)                # (F, 1)
        # broadcast this batch's mask onto its C lanes of the slab
        contrib = mask_b * selt_ref[b:b + 1, :]                    # (F, BtC)
        mask_full = contrib if mask_full is None else mask_full + contrib
    # TODO(synk): the PyTorch straight-through trick only changes gradients;
    # forward value is the plain indicator, which is what is computed here.

    # ---- complex per-channel weighting ------------------------------------
    w4 = w4_ref[...]                                               # (4, BtC) f32
    whr = w4[0:1, :]
    whi = w4[1:2, :]
    wlr = w4[2:3, :]
    wli = w4[3:4, :]

    yr = xr * whr - xi * whi + mask_full * (xr * wlr - xi * wli)   # (F, BtC)
    yi = xr * whi + xi * whr + mask_full * (xr * wli + xi * wlr)   # (F, BtC)

    # ---- irfft (ortho, n=N): reuse cf/sf transposed with the symmetry
    # weights folded in (Mosaic folds the transpose into the MXU op or emits
    # a single XLU transpose per grid step).
    wsym = wsym_ref[...]                                           # (F, 1) f32
    yrw = (yr * wsym).astype(cf.dtype)
    yiw = (yi * wsym).astype(cf.dtype)
    out = (jnp.dot(cf.T, yrw, preferred_element_type=jnp.float32)
           + jnp.dot(sf.T, yiw, preferred_element_type=jnp.float32))  # (N, BtC)
    o_ref[...] = out.astype(o_ref.dtype)


def _dft_matrices(n_seq):
    f_bins = n_seq // 2 + 1
    n = np.arange(n_seq)
    f = np.arange(f_bins)
    scale = 1.0 / np.sqrt(n_seq)
    ang = 2.0 * np.pi * np.outer(f, n) / n_seq                     # (F, N)
    cf = (np.cos(ang) * scale).astype(np.float32)                  # Re of rfft matrix
    sf = (-np.sin(ang) * scale).astype(np.float32)                 # Im of rfft matrix
    # conjugate-symmetric weights for the inverse (imag of DC/Nyquist ignored,
    # matching torch/pocketfft c2r semantics):  irfft = cf^T @ (w*Yr) + sf^T @ (w*Yi)
    wsym = np.full((f_bins, 1), 2.0, dtype=np.float32)
    wsym[0, 0] = 1.0
    if n_seq % 2 == 0:
        wsym[-1, 0] = 1.0
    return cf, sf, wsym


def _choose_bt(b, c):
    """Batches per grid step: smallest divisor of b whose lane width bt*c is
    >=256 (fills the MXU lane dim) and a multiple of 128 (BlockSpec tiling
    rule), capped at 8192 lanes.  Falls back to the whole batch (full-extent
    block, no tiling constraint)."""
    for bt in range(1, b):
        if b % bt:
            continue
        w = bt * c
        if w < 256 or w % 128 or w > 8192:
            continue
        return bt
    return b


def adaptive_spectral_block(x, complex_weight_high, complex_weight_low,
                            threshold_param, *, compute_dtype=jnp.bfloat16):
    b, n_seq, c = x.shape
    f_bins = n_seq // 2 + 1
    out_dtype = x.dtype

    bt = _choose_bt(b, c)
    num_groups = b // bt
    btc = bt * c

    cf_np, sf_np, wsym_np = _dft_matrices(n_seq)
    cf = jnp.asarray(cf_np, dtype=compute_dtype)
    sf = jnp.asarray(sf_np, dtype=compute_dtype)
    wsym = jnp.asarray(wsym_np)

    # lane-dense slab: FFT axis on sublanes, batch*channel on lanes.
    x_slab = jnp.transpose(x.astype(jnp.float32), (1, 0, 2)).reshape(n_seq, b * c)
    x_slab = x_slab.astype(compute_dtype)

    wh = jnp.asarray(complex_weight_high, jnp.float32)
    wl = jnp.asarray(complex_weight_low, jnp.float32)
    w4 = jnp.stack([jnp.tile(wh[:, 0], bt), jnp.tile(wh[:, 1], bt),
                    jnp.tile(wl[:, 0], bt), jnp.tile(wl[:, 1], bt)], axis=0)  # (4, BtC)

    sel_np = np.zeros((btc, bt), np.float32)
    for j in range(bt):
        sel_np[j * c:(j + 1) * c, j] = 1.0
    sel = jnp.asarray(sel_np)                                      # (BtC, Bt)
    selt = jnp.asarray(np.ascontiguousarray(sel_np.T))             # (Bt, BtC)

    thr = jnp.reshape(jnp.asarray(threshold_param, jnp.float32), (1,))

    cd_bytes = jnp.dtype(compute_dtype).itemsize
    out_bytes = jnp.dtype(out_dtype).itemsize
    vmem_est = (2 * f_bins * n_seq * cd_bytes          # cf + sf (single-buffered)
                + 2 * n_seq * btc * cd_bytes           # x block (double-buffered)
                + 2 * n_seq * btc * out_bytes          # out block (double-buffered)
                + 10 * f_bins * btc * 4                # f32 intermediates
                + (2 << 20))
    vmem_limit = int(min(64 * 1024 * 1024, max(32 * 1024 * 1024, 2 * vmem_est)))

    cost = pl.CostEstimate(
        flops=int(8 * b * f_bins * n_seq * c + 12 * b * f_bins * c),
        transcendentals=0,
        bytes_accessed=int(b * n_seq * c * (cd_bytes + out_bytes)
                           + 2 * f_bins * n_seq * cd_bytes))

    invariant = dict(pipeline_mode=pl.Buffered(buffer_count=1))

    out_slab = pl.pallas_call(
        _adaptive_spectral_kernel,
        out_shape=jax.ShapeDtypeStruct((n_seq, b * c), out_dtype),
        grid=(num_groups,),
        in_specs=[
            pl.BlockSpec((n_seq, btc), lambda i: (0, i)),                      # x slab
            pl.BlockSpec((f_bins, n_seq), lambda i: (0, 0), **invariant),      # cf
            pl.BlockSpec((f_bins, n_seq), lambda i: (0, 0), **invariant),      # sf
            pl.BlockSpec((f_bins, 1), lambda i: (0, 0), **invariant),          # wsym
            pl.BlockSpec((4, btc), lambda i: (0, 0), **invariant),             # w4
            pl.BlockSpec((btc, bt), lambda i: (0, 0), **invariant),            # sel
            pl.BlockSpec((bt, btc), lambda i: (0, 0), **invariant),            # selT
            pl.BlockSpec(memory_space=pltpu.MemorySpace.SMEM),                 # thr
        ],
        out_specs=pl.BlockSpec((n_seq, btc), lambda i: (0, i)),
        compiler_params=pltpu.CompilerParams(
            dimension_semantics=("parallel",),
            vmem_limit_bytes=vmem_limit),
        cost_estimate=cost,
    )(x_slab, cf, sf, wsym, w4, sel, selt, thr)

    return out_slab.reshape(n_seq, b, c).transpose(1, 0, 2)        # (B, N, C)


def _reference(x, w_high, w_low, threshold):
    # pure-JAX reference mirroring the PyTorch forward
    b, n_seq, c = x.shape
    xf = jnp.fft.rfft(x.astype(jnp.float32), axis=1, norm='ortho')       # (B, F, C)
    wh = w_high[:, 0] + 1j * w_high[:, 1]
    wl = w_low[:, 0] + 1j * w_low[:, 1]
    xw = xf * wh
    energy = jnp.sum(jnp.abs(xf) ** 2, axis=-1)                          # (B, F)
    k = (energy.shape[1] - 1) // 2
    median = jnp.sort(energy, axis=1)[:, k][:, None]                     # lower median
    normalized = energy / (median + 1e-6)
    mask = (normalized < threshold).astype(jnp.float32)[..., None]       # (B, F, 1)
    xw = xw + (xf * mask) * wl
    out = jnp.fft.irfft(xw, n=n_seq, axis=1, norm='ortho')
    return out.astype(x.dtype)


if __name__ == "__main__":
    key = jax.random.PRNGKey(0)
    k_x, k_wh, k_wl, k_thr = jax.random.split(key, 4)

    B, N, C = 2, 16, 32                                            # x: (B, N, C)
    x = jax.random.normal(k_x, (B, N, C), dtype=jnp.float32)

    # deterministic synthetic parameters (module __init__ shapes)
    complex_weight_high = jax.random.normal(k_wh, (C, 2), dtype=jnp.float32) * 0.02
    complex_weight_low = jax.random.normal(k_wl, (C, 2), dtype=jnp.float32) * 0.02
    threshold_param = jax.random.uniform(k_thr, (1,), dtype=jnp.float32)[0]

    ref = _reference(x, complex_weight_high, complex_weight_low, threshold_param)

    # exact-precision path: f32 matmuls — mask decisions match the reference
    out_f32 = adaptive_spectral_block(x, complex_weight_high, complex_weight_low,
                                      threshold_param, compute_dtype=jnp.float32)
    out_f32 = jax.block_until_ready(out_f32)
    assert out_f32.shape == (B, N, C) and out_f32.dtype == x.dtype
    assert jnp.allclose(out_f32, ref, atol=1e-4, rtol=1e-4), \
        float(jnp.max(jnp.abs(out_f32 - ref)))

    # fast default path: bf16 MXU inputs, f32 accumulation.  A borderline
    # threshold comparison may legitimately flip a mask bit at bf16 precision,
    # so only a coarse sanity bound is asserted for this path.
    out_bf16 = adaptive_spectral_block(x, complex_weight_high, complex_weight_low,
                                       threshold_param)
    out_bf16 = jax.block_until_ready(out_bf16)
    assert out_bf16.shape == (B, N, C)
    assert bool(jnp.all(jnp.isfinite(out_bf16)))
    assert float(jnp.max(jnp.abs(out_bf16 - ref))) < 0.5

    print("KERNEL_OK")
</pallas_src>

<mosaic_0001>
module attributes {stable_mosaic.version = 11 : i64} {
  func.func @_adaptive_spectral_kernel(%arg0: i32, %arg1: memref<16x64xf32, #tpu.memory_space<vmem>>, %arg2: memref<9x16xf32, #tpu.memory_space<vmem>>, %arg3: memref<9x16xf32, #tpu.memory_space<vmem>>, %arg4: memref<9x1xf32, #tpu.memory_space<vmem>>, %arg5: memref<4x64xf32, #tpu.memory_space<vmem>>, %arg6: memref<64x2xf32, #tpu.memory_space<vmem>>, %arg7: memref<2x64xf32, #tpu.memory_space<vmem>>, %arg8: memref<1xf32, #tpu.memory_space<smem>>, %arg9: memref<16x64xf32, #tpu.memory_space<vmem>>) attributes {dimension_semantics = [#tpu.dimension_semantics<parallel>], iteration_bounds = array<i64: 1>, scalar_prefetch = 0 : i64, scratch_operands = 0 : i64, tpu.core_type = #tpu.core_type<tc>, window_params = [{transform_indices = @transform_0, window_bounds = array<i64: 16, 64>}, {pipeline_mode = #tpu.pipeline_mode<synchronous>, transform_indices = @transform_1, window_bounds = array<i64: 9, 16>}, {pipeline_mode = #tpu.pipeline_mode<synchronous>, transform_indices = @transform_2, window_bounds = array<i64: 9, 16>}, {pipeline_mode = #tpu.pipeline_mode<synchronous>, transform_indices = @transform_3, window_bounds = array<i64: 9, 1>}, {pipeline_mode = #tpu.pipeline_mode<synchronous>, transform_indices = @transform_4, window_bounds = array<i64: 4, 64>}, {pipeline_mode = #tpu.pipeline_mode<synchronous>, transform_indices = @transform_5, window_bounds = array<i64: 64, 2>}, {pipeline_mode = #tpu.pipeline_mode<synchronous>, transform_indices = @transform_6, window_bounds = array<i64: 2, 64>}, {transform_indices = @transform_7, window_bounds = array<i64: 1>}, {transform_indices = @transform_8, window_bounds = array<i64: 16, 64>}]} {
    %c0 = arith.constant 0 : index
    %c0_0 = arith.constant 0 : index
    %0 = vector.load %arg1[%c0, %c0_0] : memref<16x64xf32, #tpu.memory_space<vmem>>, vector<16x64xf32>
    %c0_1 = arith.constant 0 : index
    %c0_2 = arith.constant 0 : index
    %1 = vector.load %arg2[%c0_1, %c0_2] : memref<9x16xf32, #tpu.memory_space<vmem>>, vector<9x16xf32>
    %c0_3 = arith.constant 0 : index
    %c0_4 = arith.constant 0 : index
    %2 = vector.load %arg3[%c0_3, %c0_4] : memref<9x16xf32, #tpu.memory_space<vmem>>, vector<9x16xf32>
    %cst = arith.constant dense<0.000000e+00> : vector<9x64xf32>
    %3 = tpu.matmul %1, %0, %cst {dimension_numbers = #tpu.dot_dimension_numbers<[1], [0], [0], [1], [0, 0, 1, 1], [], []>} : vector<9x16xf32>, vector<16x64xf32>, vector<9x64xf32> -> vector<9x64xf32>
    %cst_5 = arith.constant dense<0.000000e+00> : vector<9x64xf32>
    %4 = tpu.matmul %2, %0, %cst_5 {dimension_numbers = #tpu.dot_dimension_numbers<[1], [0], [0], [1], [0, 0, 1, 1], [], []>} : vector<9x16xf32>, vector<16x64xf32>, vector<9x64xf32> -> vector<9x64xf32>
    %5 = arith.mulf %3, %3 : vector<9x64xf32>
    %6 = arith.mulf %4, %4 : vector<9x64xf32>
    %7 = arith.addf %5, %6 : vector<9x64xf32>
    %c0_6 = arith.constant 0 : index
    %c0_7 = arith.constant 0 : index
    %8 = vector.load %arg6[%c0_6, %c0_7] : memref<64x2xf32, #tpu.memory_space<vmem>>, vector<64x2xf32>
    %cst_8 = arith.constant dense<0.000000e+00> : vector<9x2xf32>
    %9 = tpu.matmul %7, %8, %cst_8 {dimension_numbers = #tpu.dot_dimension_numbers<[1], [0], [0], [1], [0, 0, 1, 1], [], []>} : vector<9x64xf32>, vector<64x2xf32>, vector<9x2xf32> -> vector<9x2xf32>
    %cst_9 = arith.constant 1.000000e+00 : f32
    %10 = vector.broadcast %cst_9 : f32 to vector<1x9xf32>
    %c0_10 = arith.constant 0 : index
    %11 = memref.load %arg8[%c0_10] : memref<1xf32, #tpu.memory_space<smem>>
    %12 = vector.extract_strided_slice %9 {offsets = [0, 0], sizes = [9, 1], strides = [1, 1]} : vector<9x2xf32> to vector<9x1xf32>
    %13 = tpu.transpose %12, [1, 0] : vector<9x1xf32> -> vector<1x9xf32>
    %14 = vector.broadcast %12 : vector<9x1xf32> to vector<9x9xf32>
    %15 = vector.broadcast %13 : vector<1x9xf32> to vector<9x9xf32>
    %16 = arith.cmpf olt, %14, %15 : vector<9x9xf32>
    %17 = arith.extui %16 : vector<9x9xi1> to vector<9x9xi32>
    %18 = arith.sitofp %17 : vector<9x9xi32> to vector<9x9xf32>
    %19 = vector.broadcast %12 : vector<9x1xf32> to vector<9x9xf32>
    %20 = vector.broadcast %13 : vector<1x9xf32> to vector<9x9xf32>
    %21 = arith.cmpf oeq, %19, %20 : vector<9x9xf32>
    %22 = arith.extui %21 : vector<9x9xi1> to vector<9x9xi32>
    %23 = arith.sitofp %22 : vector<9x9xi32> to vector<9x9xf32>
    %cst_11 = arith.constant dense<0.000000e+00> : vector<1x9xf32>
    %24 = tpu.matmul %10, %18, %cst_11 {dimension_numbers = #tpu.dot_dimension_numbers<[1], [0], [0], [1], [0, 0, 1, 1], [], []>} : vector<1x9xf32>, vector<9x9xf32>, vector<1x9xf32> -> vector<1x9xf32>
    %cst_12 = arith.constant dense<0.000000e+00> : vector<1x9xf32>
    %25 = tpu.matmul %10, %23, %cst_12 {dimension_numbers = #tpu.dot_dimension_numbers<[1], [0], [0], [1], [0, 0, 1, 1], [], []>} : vector<1x9xf32>, vector<9x9xf32>, vector<1x9xf32> -> vector<1x9xf32>
    %cst_13 = arith.constant 4.000000e+00 : f32
    %26 = vector.broadcast %cst_13 : f32 to vector<1x9xf32>
    %27 = arith.cmpf ole, %24, %26 : vector<1x9xf32>
    %28 = arith.addf %24, %25 : vector<1x9xf32>
    %cst_14 = arith.constant 4.000000e+00 : f32
    %29 = vector.broadcast %cst_14 : f32 to vector<1x9xf32>
    %30 = arith.cmpf ogt, %28, %29 : vector<1x9xf32>
    %31 = arith.andi %27, %30 : vector<1x9xi1>
    %cst_15 = arith.constant -1.000000e+00 : f32
    %32 = vector.broadcast %cst_15 : f32 to vector<1x9xf32>
    %33 = arith.select %31, %13, %32 : vector<1x9xi1>, vector<1x9xf32>
    %cst_16 = arith.constant dense<0xFF800000> : vector<1xf32>
    %34 = vector.multi_reduction <maximumf>, %33, %cst_16 [1] : vector<1x9xf32> to vector<1xf32>
    %35 = vector.shape_cast %34 : vector<1xf32> to vector<1x1xf32>
    %cst_17 = arith.constant 9.99999997E-7 : f32
    %36 = vector.broadcast %cst_17 : f32 to vector<1x1xf32>
    %37 = arith.addf %35, %36 : vector<1x1xf32>
    %38 = vector.broadcast %37 : vector<1x1xf32> to vector<9x1xf32>
    %39 = arith.divf %12, %38 : vector<9x1xf32>
    %40 = vector.broadcast %11 : f32 to vector<9x1xf32>
    %41 = arith.cmpf olt, %39, %40 : vector<9x1xf32>
    %42 = arith.extui %41 : vector<9x1xi1> to vector<9x1xi32>
    %43 = arith.sitofp %42 : vector<9x1xi32> to vector<9x1xf32>
    %c0_18 = arith.constant 0 : index
    %c0_19 = arith.constant 0 : index
    %44 = vector.load %arg7[%c0_18, %c0_19] : memref<2x64xf32, #tpu.memory_space<vmem>>, vector<1x64xf32>
    %45 = vector.broadcast %43 : vector<9x1xf32> to vector<9x64xf32>
    %46 = vector.broadcast %44 : vector<1x64xf32> to vector<9x64xf32>
    %47 = arith.mulf %45, %46 : vector<9x64xf32>
    %48 = vector.extract_strided_slice %9 {offsets = [0, 1], sizes = [9, 1], strides = [1, 1]} : vector<9x2xf32> to vector<9x1xf32>
    %49 = tpu.transpose %48, [1, 0] : vector<9x1xf32> -> vector<1x9xf32>
    %50 = vector.broadcast %48 : vector<9x1xf32> to vector<9x9xf32>
    %51 = vector.broadcast %49 : vector<1x9xf32> to vector<9x9xf32>
    %52 = arith.cmpf olt, %50, %51 : vector<9x9xf32>
    %53 = arith.extui %52 : vector<9x9xi1> to vector<9x9xi32>
    %54 = arith.sitofp %53 : vector<9x9xi32> to vector<9x9xf32>
    %55 = vector.broadcast %48 : vector<9x1xf32> to vector<9x9xf32>
    %56 = vector.broadcast %49 : vector<1x9xf32> to vector<9x9xf32>
    %57 = arith.cmpf oeq, %55, %56 : vector<9x9xf32>
    %58 = arith.extui %57 : vector<9x9xi1> to vector<9x9xi32>
    %59 = arith.sitofp %58 : vector<9x9xi32> to vector<9x9xf32>
    %cst_20 = arith.constant dense<0.000000e+00> : vector<1x9xf32>
    %60 = tpu.matmul %10, %54, %cst_20 {dimension_numbers = #tpu.dot_dimension_numbers<[1], [0], [0], [1], [0, 0, 1, 1], [], []>} : vector<1x9xf32>, vector<9x9xf32>, vector<1x9xf32> -> vector<1x9xf32>
    %cst_21 = arith.constant dense<0.000000e+00> : vector<1x9xf32>
    %61 = tpu.matmul %10, %59, %cst_21 {dimension_numbers = #tpu.dot_dimension_numbers<[1], [0], [0], [1], [0, 0, 1, 1], [], []>} : vector<1x9xf32>, vector<9x9xf32>, vector<1x9xf32> -> vector<1x9xf32>
    %cst_22 = arith.constant 4.000000e+00 : f32
    %62 = vector.broadcast %cst_22 : f32 to vector<1x9xf32>
    %63 = arith.cmpf ole, %60, %62 : vector<1x9xf32>
    %64 = arith.addf %60, %61 : vector<1x9xf32>
    %cst_23 = arith.constant 4.000000e+00 : f32
    %65 = vector.broadcast %cst_23 : f32 to vector<1x9xf32>
    %66 = arith.cmpf ogt, %64, %65 : vector<1x9xf32>
    %67 = arith.andi %63, %66 : vector<1x9xi1>
    %cst_24 = arith.constant -1.000000e+00 : f32
    %68 = vector.broadcast %cst_24 : f32 to vector<1x9xf32>
    %69 = arith.select %67, %49, %68 : vector<1x9xi1>, vector<1x9xf32>
    %cst_25 = arith.constant dense<0xFF800000> : vector<1xf32>
    %70 = vector.multi_reduction <maximumf>, %69, %cst_25 [1] : vector<1x9xf32> to vector<1xf32>
    %71 = vector.shape_cast %70 : vector<1xf32> to vector<1x1xf32>
    %cst_26 = arith.constant 9.99999997E-7 : f32
    %72 = vector.broadcast %cst_26 : f32 to vector<1x1xf32>
    %73 = arith.addf %71, %72 : vector<1x1xf32>
    %74 = vector.broadcast %73 : vector<1x1xf32> to vector<9x1xf32>
    %75 = arith.divf %48, %74 : vector<9x1xf32>
    %76 = vector.broadcast %11 : f32 to vector<9x1xf32>
    %77 = arith.cmpf olt, %75, %76 : vector<9x1xf32>
    %78 = arith.extui %77 : vector<9x1xi1> to vector<9x1xi32>
    %79 = arith.sitofp %78 : vector<9x1xi32> to vector<9x1xf32>
    %c1 = arith.constant 1 : index
    %c0_27 = arith.constant 0 : index
    %80 = vector.load %arg7[%c1, %c0_27] : memref<2x64xf32, #tpu.memory_space<vmem>>, vector<1x64xf32>
    %81 = vector.broadcast %79 : vector<9x1xf32> to vector<9x64xf32>
    %82 = vector.broadcast %80 : vector<1x64xf32> to vector<9x64xf32>
    %83 = arith.mulf %81, %82 : vector<9x64xf32>
    %84 = arith.addf %47, %83 : vector<9x64xf32>
    %c0_28 = arith.constant 0 : index
    %c0_29 = arith.constant 0 : index
    %85 = vector.load %arg5[%c0_28, %c0_29] : memref<4x64xf32, #tpu.memory_space<vmem>>, vector<4x64xf32>
    %86 = vector.extract_strided_slice %85 {offsets = [0, 0], sizes = [1, 64], strides = [1, 1]} : vector<4x64xf32> to vector<1x64xf32>
    %87 = vector.extract_strided_slice %85 {offsets = [1, 0], sizes = [1, 64], strides = [1, 1]} : vector<4x64xf32> to vector<1x64xf32>
    %88 = vector.extract_strided_slice %85 {offsets = [2, 0], sizes = [1, 64], strides = [1, 1]} : vector<4x64xf32> to vector<1x64xf32>
    %89 = vector.extract_strided_slice %85 {offsets = [3, 0], sizes = [1, 64], strides = [1, 1]} : vector<4x64xf32> to vector<1x64xf32>
    %90 = vector.broadcast %86 : vector<1x64xf32> to vector<9x64xf32>
    %91 = arith.mulf %3, %90 : vector<9x64xf32>
    %92 = vector.broadcast %87 : vector<1x64xf32> to vector<9x64xf32>
    %93 = arith.mulf %4, %92 : vector<9x64xf32>
    %94 = arith.subf %91, %93 : vector<9x64xf32>
    %95 = vector.broadcast %88 : vector<1x64xf32> to vector<9x64xf32>
    %96 = arith.mulf %3, %95 : vector<9x64xf32>
    %97 = vector.broadcast %89 : vector<1x64xf32> to vector<9x64xf32>
    %98 = arith.mulf %4, %97 : vector<9x64xf32>
    %99 = arith.subf %96, %98 : vector<9x64xf32>
    %100 = arith.mulf %84, %99 : vector<9x64xf32>
    %101 = arith.addf %94, %100 : vector<9x64xf32>
    %102 = vector.broadcast %87 : vector<1x64xf32> to vector<9x64xf32>
    %103 = arith.mulf %3, %102 : vector<9x64xf32>
    %104 = vector.broadcast %86 : vector<1x64xf32> to vector<9x64xf32>
    %105 = arith.mulf %4, %104 : vector<9x64xf32>
    %106 = arith.addf %103, %105 : vector<9x64xf32>
    %107 = vector.broadcast %89 : vector<1x64xf32> to vector<9x64xf32>
    %108 = arith.mulf %3, %107 : vector<9x64xf32>
    %109 = vector.broadcast %88 : vector<1x64xf32> to vector<9x64xf32>
    %110 = arith.mulf %4, %109 : vector<9x64xf32>
    %111 = arith.addf %108, %110 : vector<9x64xf32>
    %112 = arith.mulf %84, %111 : vector<9x64xf32>
    %113 = arith.addf %106, %112 : vector<9x64xf32>
    %c0_30 = arith.constant 0 : index
    %c0_31 = arith.constant 0 : index
    %114 = vector.load %arg4[%c0_30, %c0_31] : memref<9x1xf32, #tpu.memory_space<vmem>>, vector<9x1xf32>
    %115 = vector.broadcast %114 : vector<9x1xf32> to vector<9x64xf32>
    %116 = arith.mulf %101, %115 : vector<9x64xf32>
    %117 = vector.broadcast %114 : vector<9x1xf32> to vector<9x64xf32>
    %118 = arith.mulf %113, %117 : vector<9x64xf32>
    %119 = tpu.transpose %1, [1, 0] : vector<9x16xf32> -> vector<16x9xf32>
    %cst_32 = arith.constant dense<0.000000e+00> : vector<16x64xf32>
    %120 = tpu.matmul %119, %116, %cst_32 {dimension_numbers = #tpu.dot_dimension_numbers<[1], [0], [0], [1], [0, 0, 1, 1], [], []>} : vector<16x9xf32>, vector<9x64xf32>, vector<16x64xf32> -> vector<16x64xf32>
    %121 = tpu.transpose %2, [1, 0] : vector<9x16xf32> -> vector<16x9xf32>
    %cst_33 = arith.constant dense<0.000000e+00> : vector<16x64xf32>
    %122 = tpu.matmul %121, %118, %cst_33 {dimension_numbers = #tpu.dot_dimension_numbers<[1], [0], [0], [1], [0, 0, 1, 1], [], []>} : vector<16x9xf32>, vector<9x64xf32>, vector<16x64xf32> -> vector<16x64xf32>
    %123 = arith.addf %120, %122 : vector<16x64xf32>
    %c0_34 = arith.constant 0 : index
    %c0_35 = arith.constant 0 : index
    %124 = vector.load %arg9[%c0_34, %c0_35] : memref<16x64xf32, #tpu.memory_space<vmem>>, vector<16x64xf32>
    tpu.vector_store %arg9[%c0_34, %c0_35], %123 {strides = array<i32>} : memref<16x64xf32, #tpu.memory_space<vmem>>, vector<16x64xf32>,
    return
  }
  func.func @transform_0(%arg0: i32) -> (i32, i32) {
    %c0_i32 = arith.constant 0 : i32
    %c0_i32_0 = arith.constant 0 : i32
    return %c0_i32, %arg0 : i32, i32
  }
  func.func @transform_1(%arg0: i32) -> (i32, i32) {
    %c0_i32 = arith.constant 0 : i32
    %c0_i32_0 = arith.constant 0 : i32
    %c0_i32_1 = arith.constant 0 : i32
    return %c0_i32, %c0_i32_0 : i32, i32
  }
  func.func @transform_2(%arg0: i32) -> (i32, i32) {
    %c0_i32 = arith.constant 0 : i32
    %c0_i32_0 = arith.constant 0 : i32
    %c0_i32_1 = arith.constant 0 : i32
    return %c0_i32, %c0_i32_0 : i32, i32
  }
  func.func @transform_3(%arg0: i32) -> (i32, i32) {
    %c0_i32 = arith.constant 0 : i32
    %c0_i32_0 = arith.constant 0 : i32
    %c0_i32_1 = arith.constant 0 : i32
    return %c0_i32, %c0_i32_0 : i32, i32
  }
  func.func @transform_4(%arg0: i32) -> (i32, i32) {
    %c0_i32 = arith.constant 0 : i32
    %c0_i32_0 = arith.constant 0 : i32
    %c0_i32_1 = arith.constant 0 : i32
    return %c0_i32, %c0_i32_0 : i32, i32
  }
  func.func @transform_5(%arg0: i32) -> (i32, i32) {
    %c0_i32 = arith.constant 0 : i32
    %c0_i32_0 = arith.constant 0 : i32
    %c0_i32_1 = arith.constant 0 : i32
    return %c0_i32, %c0_i32_0 : i32, i32
  }
  func.func @transform_6(%arg0: i32) -> (i32, i32) {
    %c0_i32 = arith.constant 0 : i32
    %c0_i32_0 = arith.constant 0 : i32
    %c0_i32_1 = arith.constant 0 : i32
    return %c0_i32, %c0_i32_0 : i32, i32
  }
  func.func @transform_7(%arg0: i32) -> i32 {
    %c0_i32 = arith.constant 0 : i32
    %c0_i32_0 = arith.constant 0 : i32
    return %c0_i32 : i32
  }
  func.func @transform_8(%arg0: i32) -> (i32, i32) {
    %c0_i32 = arith.constant 0 : i32
    %c0_i32_0 = arith.constant 0 : i32
    return %c0_i32, %arg0 : i32, i32
  }
}

</mosaic_0001>

<llo_original>
// kernel: tpu_custom_call.1
$region0: #{tpu_custom_call.1}
  #allocation0 [shape = 'u32[]', space=smem, size = 0x4, offset = 0x4, fixed_abs, tag = 'smem constant byte address 0x4 - core index']
  #allocation1 [shape = 'u32[144,128]{1,0:T(1,128)}', space=vmem, size = 0x12000, scoped, tag = 'internal scratch']
  #allocation2 [shape = 'f32[1]{0:T(128)S(6)}', space=smem, size = 0x200, scoped, tag = 'scoped memory for tpu_custom_call.1']
  %s0 = inlined_call_operand.vmem [shape: f32[16,64], index: 0, kind: input, shape index: {}]
  %s1 = inlined_call_operand.vmem [shape: f32[9,16], index: 1, kind: input, shape index: {}]
  %s2 = inlined_call_operand.vmem [shape: f32[9,16], index: 2, kind: input, shape index: {}]
  %s3 = inlined_call_operand.vmem [shape: f32[9,1], index: 3, kind: input, shape index: {}]
  %s4 = inlined_call_operand.vmem [shape: f32[4,64], index: 4, kind: input, shape index: {}]
  %s5 = inlined_call_operand.vmem [shape: f32[64,2], index: 5, kind: input, shape index: {}]
  %s6 = inlined_call_operand.vmem [shape: f32[2,64], index: 6, kind: input, shape index: {}]
  %s7 = inlined_call_operand.<no memory space> [shape: f32[1], index: 7, kind: input, shape index: {}]
  %s8 = inlined_call_operand.hbm [shape: f32[16,64], index: 8, kind: output, shape index: {}]
  %s9 = sld [smem:[#allocation0]]
  $region42: #{tpu_custom_call.1} parent=0
    _
  %s11 = ssub.s32 1, %s9
  %s12 = scalar_select 0, %s11, %s9
  %13 = sst [smem:[#allocation2]] %s7
  $region1: #{tpu_custom_call.1} parent=0
    #allocation3 [shape = 'u8[8192]{0}', space=vmem, size = 0x2000, scoped, tag = 'output window, operand 0, single buffered']
    #allocation4 [shape = 's32[1]{0}', space=sflag, size = 0x4, scoped, tag = 'scoped memory for tpu_custom_call.1']
    %14 = vsyncpa [#allocation4], 0
    // Predicated region
    $region2: #{tpu_custom_call.1} parent=1 // pred_check
      _
    $region3: #{tpu_custom_call.1} parent=1 // pred_check_branch
      %16 = sbr.rel (0) target = $region5
    $region4: #{tpu_custom_call.1} parent=1 // pred_region
      _
    $region5: #{tpu_custom_call.1} parent=1 // pred_fallthru
      _
    // Predicated region
    $region6: #{tpu_custom_call.1} parent=1 // pred_check
      _
    $region7: #{tpu_custom_call.1} parent=1 // pred_check_branch
      %18 = sbr.rel (0) target = $region9
    $region8: #{tpu_custom_call.1} parent=1 // pred_region
      _
    $region9: #{tpu_custom_call.1} parent=1 // pred_fallthru
      _
    // Predicated region
    $region10: #{tpu_custom_call.1} parent=1 // pred_check
      _
    $region11: #{tpu_custom_call.1} parent=1 // pred_check_branch
      %20 = sbr.rel (0) target = $region13
    $region12: #{tpu_custom_call.1} parent=1 // pred_region
      _
    $region13: #{tpu_custom_call.1} parent=1 // pred_fallthru
      _
    // Predicated region
    $region14: #{tpu_custom_call.1} parent=1 // pred_check
      _
    $region15: #{tpu_custom_call.1} parent=1 // pred_check_branch
      %22 = sbr.rel (0) target = $region17
    $region16: #{tpu_custom_call.1} parent=1 // pred_region
      _
    $region17: #{tpu_custom_call.1} parent=1 // pred_fallthru
      _
    // Predicated region
    $region18: #{tpu_custom_call.1} parent=1 // pred_check
      _
    $region19: #{tpu_custom_call.1} parent=1 // pred_check_branch
      %24 = sbr.rel (0) target = $region21
    $region20: #{tpu_custom_call.1} parent=1 // pred_region
      _
    $region21: #{tpu_custom_call.1} parent=1 // pred_fallthru
      _
    // Predicated region
    $region22: #{tpu_custom_call.1} parent=1 // pred_check
      _
    $region23: #{tpu_custom_call.1} parent=1 // pred_check_branch
      %26 = sbr.rel (0) target = $region25
    $region24: #{tpu_custom_call.1} parent=1 // pred_region
      _
    $region25: #{tpu_custom_call.1} parent=1 // pred_fallthru
      _
    // Predicated region
    $region26: #{tpu_custom_call.1} parent=1 // pred_check
      _
    $region27: #{tpu_custom_call.1} parent=1 // pred_check_branch
      %28 = sbr.rel (0) target = $region29
    $region28: #{tpu_custom_call.1} parent=1 // pred_region
      _
    $region29: #{tpu_custom_call.1} parent=1 // pred_fallthru
      _
    // Predicated region
    $region30: #{tpu_custom_call.1} parent=1 // pred_check
      _
    $region31: #{tpu_custom_call.1} parent=1 // pred_check_branch
      %30 = sbr.rel (0) target = $region33
    $region32: #{tpu_custom_call.1} parent=1 // pred_region
      _
    $region33: #{tpu_custom_call.1} parent=1 // pred_fallthru
      _
    %v31 = vld [vmem:[%s0] sm:$0xff]
    %v32 = vld [vmem:[%s0 + $0x8] sm:$0xff]
    %v33 = vld [vmem:[%s1] sm:$0xff]
    %v34 = vld [vmem:[%s1 + $0x8] sm:$0x1]
    %v35 = vld [vmem:[%s2] sm:$0xff]
    %v36 = vld [vmem:[%s2 + $0x8] sm:$0x1]
    %vm37 = vcmask 130048
    %v39 = vsel %vm37, %v33, 0
    %v42 = vsel %vm37, %v34, 0
    %44 = vmatprep.subr.mxu0 0.0
    %45 = vmatpush1.msra.mxu0 %v31
    %46 = vmatprep.subr.mxu0 0.0
    %47 = vmatpush1.msra.mxu0 %v32
    %48 = vmatprep.subr.mxu0 0.0
    %49 = vmatpush1.msra.mxu0 0.0
    %50 = vmatprep.subr.mxu0 0.0
    %51 = vmatpush1.msra.mxu0 0.0
    %52 = vmatprep.subr.mxu0 0.0
    %53 = vmatpush1.msra.mxu0 0.0
    %54 = vmatprep.subr.mxu0 0.0
    %55 = vmatpush1.msra.mxu0 0.0
    %56 = vmatprep.subr.mxu0 0.0
    %57 = vmatpush1.msra.mxu0 0.0
    %58 = vmatprep.subr.mxu0 0.0
    %59 = vmatpush1.msra.mxu0 0.0
    %60 = vmatprep.subr.mxu0 0.0
    %61 = vmatpush1.msra.mxu0 0.0
    %62 = vmatprep.subr.mxu0 0.0
    %63 = vmatpush1.msra.mxu0 0.0
    %64 = vmatprep.subr.mxu0 0.0
    %65 = vmatpush1.msra.mxu0 0.0
    %66 = vmatprep.subr.mxu0 0.0
    %67 = vmatpush1.msra.mxu0 0.0
    %68 = vmatprep.subr.mxu0 0.0
    %69 = vmatpush1.msra.mxu0 0.0
    %70 = vmatprep.subr.mxu0 0.0
    %71 = vmatpush1.msra.mxu0 0.0
    %72 = vmatprep.subr.mxu0 0.0
    %73 = vmatpush1.msra.mxu0 0.0
    %74 = vmatprep.subr.mxu0 0.0
    %75 = vmatpush1.msra.mxu0 0.0
    %76 = vmatprep.subr.mxu0 0.0
    %77 = vmatpush1.msra.mxu0 0.0
    %78 = vmatprep.subr.mxu0 0.0
    %79 = vmatpush1.msra.mxu0 0.0
    %80 = vmatprep.subr.mxu0 0.0
    %81 = vmatpush1.msra.mxu0 0.0
    %82 = vmatprep.subr.mxu0 0.0
    %83 = vmatpush1.msra.mxu0 0.0
    %84 = vmatprep.subr.mxu0 0.0
    %85 = vmatpush1.msra.mxu0 0.0
    %86 = vmatprep.subr.mxu0 0.0
    %87 = vmatpush1.msra.mxu0 0.0
    %88 = vmatprep.subr.mxu0 0.0
    %89 = vmatpush1.msra.mxu0 0.0
    %90 = vmatprep.subr.mxu0 0.0
    %91 = vmatpush1.msra.mxu0 0.0
    %92 = vmatprep.subr.mxu0 0.0
    %93 = vmatpush1.msra.mxu0 0.0
    %94 = vmatprep.subr.mxu0 0.0
    %95 = vmatpush1.msra.mxu0 0.0
    %96 = vmatprep.subr.mxu0 0.0
    %97 = vmatpush1.msra.mxu0 0.0
    %98 = vmatprep.subr.mxu0 0.0
    %99 = vmatpush1.msra.mxu0 0.0
    %100 = vmatprep.subr.mxu0 0.0
    %101 = vmatpush1.msra.mxu0 0.0
    %102 = vmatprep.subr.mxu0 0.0
    %103 = vmatpush1.msra.mxu0 0.0
    %104 = vmatprep.subr.mxu0 0.0
    %105 = vmatpush1.msra.mxu0 0.0
    %106 = vmatprep.subr.mxu0 0.0
    %107 = vmatpush1.msra.mxu0 0.0
    %108 = vmatprep.mubr.f32.mxu0 0.0
    %109 = vmatmul.mubr.f32.gmra.mrb[0].mxu0 %v39
    %v110 = vpop.f32.mrb[0].mxu0
    %v111 = vadd.f32 0.0, %v110
    %v112 = vpop.f32.mrb[0].mxu0
    %113 = vmatprep.mubr.f32.mxu0 0.0
    %114 = vmatmul.mubr.f32.gmra.mrb[0].mxu0 %v42
    %v115 = vpop.f32.mrb[0].mxu0
    %v116 = vadd.f32 0.0, %v115
    %v117 = vpop.f32.mrb[0].mxu0
    %118 = vdwg.mxu0
    %v120 = vsel %vm37, %v35, 0
    %v123 = vsel %vm37, %v36, 0
    %125 = vmatprep.subr.mxu0 0.0
    %126 = vmatpush1.msra.mxu0 %v31
    %127 = vmatprep.subr.mxu0 0.0
    %128 = vmatpush1.msra.mxu0 %v32
    %129 = vmatprep.subr.mxu0 0.0
    %130 = vmatpush1.msra.mxu0 0.0
    %131 = vmatprep.subr.mxu0 0.0
    %132 = vmatpush1.msra.mxu0 0.0
    %133 = vmatprep.subr.mxu0 0.0
    %134 = vmatpush1.msra.mxu0 0.0
    %135 = vmatprep.subr.mxu0 0.0
    %136 = vmatpush1.msra.mxu0 0.0
    %137 = vmatprep.subr.mxu0 0.0
    %138 = vmatpush1.msra.mxu0 0.0
    %139 = vmatprep.subr.mxu0 0.0
    %140 = vmatpush1.msra.mxu0 0.0
    %141 = vmatprep.subr.mxu0 0.0
    %142 = vmatpush1.msra.mxu0 0.0
    %143 = vmatprep.subr.mxu0 0.0
    %144 = vmatpush1.msra.mxu0 0.0
    %145 = vmatprep.subr.mxu0 0.0
    %146 = vmatpush1.msra.mxu0 0.0
    %147 = vmatprep.subr.mxu0 0.0
    %148 = vmatpush1.msra.mxu0 0.0
    %149 = vmatprep.subr.mxu0 0.0
    %150 = vmatpush1.msra.mxu0 0.0
    %151 = vmatprep.subr.mxu0 0.0
    %152 = vmatpush1.msra.mxu0 0.0
    %153 = vmatprep.subr.mxu0 0.0
    %154 = vmatpush1.msra.mxu0 0.0
    %155 = vmatprep.subr.mxu0 0.0
    %156 = vmatpush1.msra.mxu0 0.0
    %157 = vmatprep.subr.mxu0 0.0
    %158 = vmatpush1.msra.mxu0 0.0
    %159 = vmatprep.subr.mxu0 0.0
    %160 = vmatpush1.msra.mxu0 0.0
    %161 = vmatprep.subr.mxu0 0.0
    %162 = vmatpush1.msra.mxu0 0.0
    %163 = vmatprep.subr.mxu0 0.0
    %164 = vmatpush1.msra.mxu0 0.0
    %165 = vmatprep.subr.mxu0 0.0
    %166 = vmatpush1.msra.mxu0 0.0
    %167 = vmatprep.subr.mxu0 0.0
    %168 = vmatpush1.msra.mxu0 0.0
    %169 = vmatprep.subr.mxu0 0.0
    %170 = vmatpush1.msra.mxu0 0.0
    %171 = vmatprep.subr.mxu0 0.0
    %172 = vmatpush1.msra.mxu0 0.0
    %173 = vmatprep.subr.mxu0 0.0
    %174 = vmatpush1.msra.mxu0 0.0
    %175 = vmatprep.subr.mxu0 0.0
    %176 = vmatpush1.msra.mxu0 0.0
    %177 = vmatprep.subr.mxu0 0.0
    %178 = vmatpush1.msra.mxu0 0.0
    %179 = vmatprep.subr.mxu0 0.0
    %180 = vmatpush1.msra.mxu0 0.0
    %181 = vmatprep.subr.mxu0 0.0
    %182 = vmatpush1.msra.mxu0 0.0
    %183 = vmatprep.subr.mxu0 0.0
    %184 = vmatpush1.msra.mxu0 0.0
    %185 = vmatprep.subr.mxu0 0.0
    %186 = vmatpush1.msra.mxu0 0.0
    %187 = vmatprep.subr.mxu0 0.0
    %188 = vmatpush1.msra.mxu0 0.0
    %189 = vmatprep.mubr.f32.mxu0 0.0
    %190 = vmatmul.mubr.f32.gmra.mrb[0].mxu0 %v120
    %v191 = vpop.f32.mrb[0].mxu0
    %v192 = vadd.f32 0.0, %v191
    %v193 = vpop.f32.mrb[0].mxu0
    %194 = vmatprep.mubr.f32.mxu0 0.0
    %195 = vmatmul.mubr.f32.gmra.mrb[0].mxu0 %v123
    %v196 = vpop.f32.mrb[0].mxu0
    %v197 = vadd.f32 0.0, %v196
    %v198 = vpop.f32.mrb[0].mxu0
    %199 = vdwg.mxu0
    %v200 = vmul.f32 %v111, %v111
    %v201 = vmul.f32 %v116, %v116
    %v202 = vmul.f32 %v192, %v192
    %v203 = vmul.f32 %v197, %v197
    %v204 = vadd.f32 %v200, %v202
    %v205 = vadd.f32 %v201, %v203
    %v206 = vld [vmem:[%s5] sm:$0xff]
    %v207 = vld [vmem:[%s5 + $0x8] sm:$0xff]
    %v208 = vld [vmem:[%s5 + $0x10] sm:$0xff]
    %v209 = vld [vmem:[%s5 + $0x18] sm:$0xff]
    %v210 = vld [vmem:[%s5 + $0x20] sm:$0xff]
    %v211 = vld [vmem:[%s5 + $0x28] sm:$0xff]
    %v212 = vld [vmem:[%s5 + $0x30] sm:$0xff]
    %v213 = vld [vmem:[%s5 + $0x38] sm:$0xff]
    %vm214 = vcmask 523264
    %v216 = vsel %vm214, %v204, 0
    %v219 = vsel %vm214, %v205, 0
    %221 = vmatprep.subr.mxu0 0.0
    %222 = vmatpush1.msra.mxu0 %v206
    %223 = vmatprep.subr.mxu0 0.0
    %224 = vmatpush1.msra.mxu0 %v207
    %225 = vmatprep.subr.mxu0 0.0
    %226 = vmatpush1.msra.mxu0 %v208
    %227 = vmatprep.subr.mxu0 0.0
    %228 = vmatpush1.msra.mxu0 %v209
    %229 = vmatprep.subr.mxu0 0.0
    %230 = vmatpush1.msra.mxu0 %v210
    %231 = vmatprep.subr.mxu0 0.0
    %232 = vmatpush1.msra.mxu0 %v211
    %233 = vmatprep.subr.mxu0 0.0
    %234 = vmatpush1.msra.mxu0 %v212
    %235 = vmatprep.subr.mxu0 0.0
    %236 = vmatpush1.msra.mxu0 %v213
    %237 = vmatprep.subr.mxu0 0.0
    %238 = vmatpush1.msra.mxu0 0.0
    %239 = vmatprep.subr.mxu0 0.0
    %240 = vmatpush1.msra.mxu0 0.0
    %241 = vmatprep.subr.mxu0 0.0
    %242 = vmatpush1.msra.mxu0 0.0
    %243 = vmatprep.subr.mxu0 0.0
    %244 = vmatpush1.msra.mxu0 0.0
    %245 = vmatprep.subr.mxu0 0.0
    %246 = vmatpush1.msra.mxu0 0.0
    %247 = vmatprep.subr.mxu0 0.0
    %248 = vmatpush1.msra.mxu0 0.0
    %249 = vmatprep.subr.mxu0 0.0
    %250 = vmatpush1.msra.mxu0 0.0
    %251 = vmatprep.subr.mxu0 0.0
    %252 = vmatpush1.msra.mxu0 0.0
    %253 = vmatprep.subr.mxu0 0.0
    %254 = vmatpush1.msra.mxu0 0.0
    %255 = vmatprep.subr.mxu0 0.0
    %256 = vmatpush1.msra.mxu0 0.0
    %257 = vmatprep.subr.mxu0 0.0
    %258 = vmatpush1.msra.mxu0 0.0
    %259 = vmatprep.subr.mxu0 0.0
    %260 = vmatpush1.msra.mxu0 0.0
    %261 = vmatprep.subr.mxu0 0.0
    %262 = vmatpush1.msra.mxu0 0.0
    %263 = vmatprep.subr.mxu0 0.0
    %264 = vmatpush1.msra.mxu0 0.0
    %265 = vmatprep.subr.mxu0 0.0
    %266 = vmatpush1.msra.mxu0 0.0
    %267 = vmatprep.subr.mxu0 0.0
    %268 = vmatpush1.msra.mxu0 0.0
    %269 = vmatprep.subr.mxu0 0.0
    %270 = vmatpush1.msra.mxu0 0.0
    %271 = vmatprep.subr.mxu0 0.0
    %272 = vmatpush1.msra.mxu0 0.0
    %273 = vmatprep.subr.mxu0 0.0
    %274 = vmatpush1.msra.mxu0 0.0
    %275 = vmatprep.subr.mxu0 0.0
    %276 = vmatpush1.msra.mxu0 0.0
    %277 = vmatprep.subr.mxu0 0.0
    %278 = vmatpush1.msra.mxu0 0.0
    %279 = vmatprep.subr.mxu0 0.0
    %280 = vmatpush1.msra.mxu0 0.0
    %281 = vmatprep.subr.mxu0 0.0
    %282 = vmatpush1.msra.mxu0 0.0
    %283 = vmatprep.subr.mxu0 0.0
    %284 = vmatpush1.msra.mxu0 0.0
    %285 = vmatprep.mubr.f32.mxu0 0.0
    %286 = vmatmul.mubr.f32.gmra.mrb[0].mxu0 %v216
    %v287 = vpop.f32.mrb[0].mxu0
    %v288 = vadd.f32 0.0, %v287
    %v289 = vpop.f32.mrb[0].mxu0
    %290 = vmatprep.mubr.f32.mxu0 0.0
    %291 = vmatmul.mubr.f32.gmra.mrb[0].mxu0 %v219
    %v292 = vpop.f32.mrb[0].mxu0
    %v293 = vadd.f32 0.0, %v292
    %v294 = vpop.f32.mrb[0].mxu0
    %295 = vdwg.mxu0
    %s296 = sld [smem:[#allocation2]]
    %297 = vxpose.xlu0.b32.start [1/16] %v288, 128
    %298 = vxpose.xlu0.b32.cont [2/16] %v293, 128
    %299 = vxpose.xlu0.b32.cont [3/16] 0.0, 128
    %300 = vxpose.xlu0.b32.cont [4/16] 0.0, 128
    %301 = vxpose.xlu0.b32.cont [5/16] 0.0, 128
    %302 = vxpose.xlu0.b32.cont [6/16] 0.0, 128
    %303 = vxpose.xlu0.b32.cont [7/16] 0.0, 128
    %304 = vxpose.xlu0.b32.cont [8/16] 0.0, 128
    %305 = vxpose.xlu0.b32.cont [9/16] 0.0, 128
    %306 = vxpose.xlu0.b32.cont [10/16] 0.0, 128
    %307 = vxpose.xlu0.b32.cont [11/16] 0.0, 128
    %308 = vxpose.xlu0.b32.cont [12/16] 0.0, 128
    %309 = vxpose.xlu0.b32.cont [13/16] 0.0, 128
    %310 = vxpose.xlu0.b32.cont [14/16] 0.0, 128
    %311 = vxpose.xlu0.b32.cont [15/16] 0.0, 128
    %312 = vxpose.xlu0.b32.end [16/16] 0.0, 128
    %v313 = vpop.trf.xlu0
    %v314 = vpop.trf.xlu0
    %v315 = vpop.trf.xlu0
    %v316 = vpop.trf.xlu0
    %v317 = vpop.trf.xlu0
    %v318 = vpop.trf.xlu0
    %v319 = vpop.trf.xlu0
    %v320 = vpop.trf.xlu0
    %v321 = vpop.trf.xlu0
    %v322 = vpop.trf.xlu0
    %v323 = vpop.trf.xlu0
    %v324 = vpop.trf.xlu0
    %v325 = vpop.trf.xlu0
    %v326 = vpop.trf.xlu0
    %v327 = vpop.trf.xlu0
    %v328 = vpop.trf.xlu0
    %330 = vset.pattern.permute.xlu0 0
    %331 = vperm.xlu0 %330, %v288
    %v332 = vpop.permute.xlu0 %331
    %335 = vset.pattern.permute.xlu0 0
    %336 = vperm.xlu0 %335, %v293
    %v337 = vpop.permute.xlu0 %336
    %v339 = vlaneseq
    %v340 = vshrl.u32 %v339, 7
    %v341 = vsub.s32 0, %v340
    %v342 = vrot.slane %v313, %v341
    %vm343 = vcmp.lt.f32.partialorder %v332, %v342
    %vm344 = vcmp.lt.f32.partialorder %v337, %v342
    %v345 = vsel %vm343, 1, 0
    %v346 = vsel %vm344, 1, 0
    %v347 = vcvt.s32.f32 %v345
    %v348 = vcvt.s32.f32 %v346
    %vm349 = vcmp.eq.f32.partialorder %v332, %v342
    %vm350 = vcmp.eq.f32.partialorder %v337, %v342
    %v351 = vsel %vm349, 1, 0
    %v352 = vsel %vm350, 1, 0
    %v353 = vcvt.s32.f32 %v351
    %v354 = vcvt.s32.f32 %v352
    %vm355 = vcmask 72704
    %v357 = vsel %vm355, 1.0, 0
    %vm359 = vcmask 1040384
    %v361 = vsel %vm359, %v348, 0
    %363 = vmatprep.subr.mxu0 0.0
    %364 = vmatpush1.msra.mxu0 %v347
    %365 = vmatprep.subr.mxu0 0.0
    %366 = vmatpush1.msra.mxu0 %v361
    %367 = vmatprep.subr.mxu0 0.0
    %368 = vmatpush1.msra.mxu0 0.0
    %369 = vmatprep.subr.mxu0 0.0
    %370 = vmatpush1.msra.mxu0 0.0
    %371 = vmatprep.subr.mxu0 0.0
    %372 = vmatpush1.msra.mxu0 0.0
    %373 = vmatprep.subr.mxu0 0.0
    %374 = vmatpush1.msra.mxu0 0.0
    %375 = vmatprep.subr.mxu0 0.0
    %376 = vmatpush1.msra.mxu0 0.0
    %377 = vmatprep.subr.mxu0 0.0
    %378 = vmatpush1.msra.mxu0 0.0
    %379 = vmatprep.subr.mxu0 0.0
    %380 = vmatpush1.msra.mxu0 0.0
    %381 = vmatprep.subr.mxu0 0.0
    %382 = vmatpush1.msra.mxu0 0.0
    %383 = vmatprep.subr.mxu0 0.0
    %384 = vmatpush1.msra.mxu0 0.0
    %385 = vmatprep.subr.mxu0 0.0
    %386 = vmatpush1.msra.mxu0 0.0
    %387 = vmatprep.subr.mxu0 0.0
    %388 = vmatpush1.msra.mxu0 0.0
    %389 = vmatprep.subr.mxu0 0.0
    %390 = vmatpush1.msra.mxu0 0.0
    %391 = vmatprep.subr.mxu0 0.0
    %392 = vmatpush1.msra.mxu0 0.0
    %393 = vmatprep.subr.mxu0 0.0
    %394 = vmatpush1.msra.mxu0 0.0
    %395 = vmatprep.subr.mxu0 0.0
    %396 = vmatpush1.msra.mxu0 0.0
    %397 = vmatprep.subr.mxu0 0.0
    %398 = vmatpush1.msra.mxu0 0.0
    %399 = vmatprep.subr.mxu0 0.0
    %400 = vmatpush1.msra.mxu0 0.0
    %401 = vmatprep.subr.mxu0 0.0
    %402 = vmatpush1.msra.mxu0 0.0
    %403 = vmatprep.subr.mxu0 0.0
    %404 = vmatpush1.msra.mxu0 0.0
    %405 = vmatprep.subr.mxu0 0.0
    %406 = vmatpush1.msra.mxu0 0.0
    %407 = vmatprep.subr.mxu0 0.0
    %408 = vmatpush1.msra.mxu0 0.0
    %409 = vmatprep.subr.mxu0 0.0
    %410 = vmatpush1.msra.mxu0 0.0
    %411 = vmatprep.subr.mxu0 0.0
    %412 = vmatpush1.msra.mxu0 0.0
    %413 = vmatprep.subr.mxu0 0.0
    %414 = vmatpush1.msra.mxu0 0.0
    %415 = vmatprep.subr.mxu0 0.0
    %416 = vmatpush1.msra.mxu0 0.0
    %417 = vmatprep.subr.mxu0 0.0
    %418 = vmatpush1.msra.mxu0 0.0
    %419 = vmatprep.subr.mxu0 0.0
    %420 = vmatpush1.msra.mxu0 0.0
    %421 = vmatprep.subr.mxu0 0.0
    %422 = vmatpush1.msra.mxu0 0.0
    %423 = vmatprep.subr.mxu0 0.0
    %424 = vmatpush1.msra.mxu0 0.0
    %425 = vmatprep.subr.mxu0 0.0
    %426 = vmatpush1.msra.mxu0 0.0
    %427 = vmatprep.mubr.f32.mxu0 0.0
    %428 = vmatmul.mubr.f32.gmra.mrb[0].mxu0 %v357
    %v429 = vpop.f32.mrb[0].mxu0
    %v430 = vadd.f32 0.0, %v429
    %v431 = vpop.f32.mrb[0].mxu0
    %432 = vdwg.mxu0
    %v434 = vsel %vm359, %v354, 0
    %436 = vmatprep.subr.mxu0 0.0
    %437 = vmatpush1.msra.mxu0 %v353
    %438 = vmatprep.subr.mxu0 0.0
    %439 = vmatpush1.msra.mxu0 %v434
    %440 = vmatprep.subr.mxu0 0.0
    %441 = vmatpush1.msra.mxu0 0.0
    %442 = vmatprep.subr.mxu0 0.0
    %443 = vmatpush1.msra.mxu0 0.0
    %444 = vmatprep.subr.mxu0 0.0
    %445 = vmatpush1.msra.mxu0 0.0
    %446 = vmatprep.subr.mxu0 0.0
    %447 = vmatpush1.msra.mxu0 0.0
    %448 = vmatprep.subr.mxu0 0.0
    %449 = vmatpush1.msra.mxu0 0.0
    %450 = vmatprep.subr.mxu0 0.0
    %451 = vmatpush1.msra.mxu0 0.0
    %452 = vmatprep.subr.mxu0 0.0
    %453 = vmatpush1.msra.mxu0 0.0
    %454 = vmatprep.subr.mxu0 0.0
    %455 = vmatpush1.msra.mxu0 0.0
    %456 = vmatprep.subr.mxu0 0.0
    %457 = vmatpush1.msra.mxu0 0.0
    %458 = vmatprep.subr.mxu0 0.0
    %459 = vmatpush1.msra.mxu0 0.0
    %460 = vmatprep.subr.mxu0 0.0
    %461 = vmatpush1.msra.mxu0 0.0
    %462 = vmatprep.subr.mxu0 0.0
    %463 = vmatpush1.msra.mxu0 0.0
    %464 = vmatprep.subr.mxu0 0.0
    %465 = vmatpush1.msra.mxu0 0.0
    %466 = vmatprep.subr.mxu0 0.0
    %467 = vmatpush1.msra.mxu0 0.0
    %468 = vmatprep.subr.mxu0 0.0
    %469 = vmatpush1.msra.mxu0 0.0
    %470 = vmatprep.subr.mxu0 0.0
    %471 = vmatpush1.msra.mxu0 0.0
    %472 = vmatprep.subr.mxu0 0.0
    %473 = vmatpush1.msra.mxu0 0.0
    %474 = vmatprep.subr.mxu0 0.0
    %475 = vmatpush1.msra.mxu0 0.0
    %476 = vmatprep.subr.mxu0 0.0
    %477 = vmatpush1.msra.mxu0 0.0
    %478 = vmatprep.subr.mxu0 0.0
    %479 = vmatpush1.msra.mxu0 0.0
    %480 = vmatprep.subr.mxu0 0.0
    %481 = vmatpush1.msra.mxu0 0.0
    %482 = vmatprep.subr.mxu0 0.0
    %483 = vmatpush1.msra.mxu0 0.0
    %484 = vmatprep.subr.mxu0 0.0
    %485 = vmatpush1.msra.mxu0 0.0
    %486 = vmatprep.subr.mxu0 0.0
    %487 = vmatpush1.msra.mxu0 0.0
    %488 = vmatprep.subr.mxu0 0.0
    %489 = vmatpush1.msra.mxu0 0.0
    %490 = vmatprep.subr.mxu0 0.0
    %491 = vmatpush1.msra.mxu0 0.0
    %492 = vmatprep.subr.mxu0 0.0
    %493 = vmatpush1.msra.mxu0 0.0
    %494 = vmatprep.subr.mxu0 0.0
    %495 = vmatpush1.msra.mxu0 0.0
    %496 = vmatprep.subr.mxu0 0.0
    %497 = vmatpush1.msra.mxu0 0.0
    %498 = vmatprep.subr.mxu0 0.0
    %499 = vmatpush1.msra.mxu0 0.0
    %500 = vmatprep.mubr.f32.mxu0 0.0
    %501 = vmatmul.mubr.f32.gmra.mrb[0].mxu0 %v357
    %v502 = vpop.f32.mrb[0].mxu0
    %v503 = vadd.f32 0.0, %v502
    %v504 = vpop.f32.mrb[0].mxu0
    %505 = vdwg.mxu0
    %vm506 = vcmp.le.f32.partialorder %v430, 4.0
    %v507 = vadd.f32 %v430, %v503
    %vm508 = vcmp.gt.f32.partialorder %v507, 4.0
    %vm509 = vmand %vm506, %vm508
    %v510 = vsel %vm509, %v313, -1.0
    %vm511 = vcmask 65536
    %v512 = vsel %vm511, %v510, -inf
    %513 = vmax.xlane.f32.xlu0 %v512
    %v514 = vpop.xlane.xlu0 %513
    %v515 = vadd.f32 %v514, 1e-06
    %v516 = vlaneseq
    %v517 = vshrl.u32 %v516, 7
    %v518 = vsub.s32 0, %v517
    %v519 = vrot.slane %v515, %v518
    %v520 = vrcp.pop %v519
    %v521 = vmul.f32 %v288, %v520
    %v522 = vmul.f32 %v293, %v520
    %v523 = vstv %s296
    %vm524 = vcmp.lt.f32.partialorder %v521, %v523
    %vm525 = vcmp.lt.f32.partialorder %v522, %v523
    %v526 = vsel %vm524, 1, 0
    %v527 = vsel %vm525, 1, 0
    %v528 = vcvt.s32.f32 %v526
    %v529 = vcvt.s32.f32 %v527
    %v530 = vld [vmem:[%s6] sm:$0x1]
    %532 = vset.pattern.permute.xlu0 0
    %533 = vperm.xlu0 %532, %v528
    %v534 = vpop.permute.xlu0 %533
    %537 = vset.pattern.permute.xlu0 0
    %538 = vperm.xlu0 %537, %v529
    %v539 = vpop.permute.xlu0 %538
    %v541 = vlaneseq
    %v542 = vshrl.u32 %v541, 7
    %v543 = vsub.s32 0, %v542
    %v544 = vrot.slane %v530, %v543
    %v545 = vmul.f32 %v534, %v544
    %v546 = vmul.f32 %v539, %v544
    %547 = vrot.lane.b32.xlu0 %v288, 127
    %v548 = vpop.permute.xlu0 %547
    %549 = vrot.lane.b32.xlu0 %v293, 127
    %v550 = vpop.permute.xlu0 %549
    %553 = vxpose.xlu0.b32.start [1/16] %v548, 128
    %554 = vxpose.xlu0.b32.cont [2/16] %v550, 128
    %555 = vxpose.xlu0.b32.cont [3/16] 0.0, 128
    %556 = vxpose.xlu0.b32.cont [4/16] 0.0, 128
    %557 = vxpose.xlu0.b32.cont [5/16] 0.0, 128
    %558 = vxpose.xlu0.b32.cont [6/16] 0.0, 128
    %559 = vxpose.xlu0.b32.cont [7/16] 0.0, 128
    %560 = vxpose.xlu0.b32.cont [8/16] 0.0, 128
    %561 = vxpose.xlu0.b32.cont [9/16] 0.0, 128
    %562 = vxpose.xlu0.b32.cont [10/16] 0.0, 128
    %563 = vxpose.xlu0.b32.cont [11/16] 0.0, 128
    %564 = vxpose.xlu0.b32.cont [12/16] 0.0, 128
    %565 = vxpose.xlu0.b32.cont [13/16] 0.0, 128
    %566 = vxpose.xlu0.b32.cont [14/16] 0.0, 128
    %567 = vxpose.xlu0.b32.cont [15/16] 0.0, 128
    %568 = vxpose.xlu0.b32.end [16/16] 0.0, 128
    %v569 = vpop.trf.xlu0
    %v570 = vpop.trf.xlu0
    %v571 = vpop.trf.xlu0
    %v572 = vpop.trf.xlu0
    %v573 = vpop.trf.xlu0
    %v574 = vpop.trf.xlu0
    %v575 = vpop.trf.xlu0
    %v576 = vpop.trf.xlu0
    %v577 = vpop.trf.xlu0
    %v578 = vpop.trf.xlu0
    %v579 = vpop.trf.xlu0
    %v580 = vpop.trf.xlu0
    %v581 = vpop.trf.xlu0
    %v582 = vpop.trf.xlu0
    %v583 = vpop.trf.xlu0
    %v584 = vpop.trf.xlu0
    %585 = vset.pattern.permute.xlu0 1
    %586 = vperm.xlu0 %585, %v288
    %v587 = vpop.permute.xlu0 %586
    %589 = vset.pattern.permute.xlu0 1
    %590 = vperm.xlu0 %589, %v293
    %v591 = vpop.permute.xlu0 %590
    %v593 = vlaneseq
    %v594 = vshrl.u32 %v593, 7
    %v595 = vsub.s32 0, %v594
    %v596 = vrot.slane %v569, %v595
    %vm597 = vcmp.lt.f32.partialorder %v587, %v596
    %vm598 = vcmp.lt.f32.partialorder %v591, %v596
    %v599 = vsel %vm597, 1, 0
    %v600 = vsel %vm598, 1, 0
    %v601 = vcvt.s32.f32 %v599
    %v602 = vcvt.s32.f32 %v600
    %vm603 = vcmp.eq.f32.partialorder %v587, %v596
    %vm604 = vcmp.eq.f32.partialorder %v591, %v596
    %v605 = vsel %vm603, 1, 0
    %v606 = vsel %vm604, 1, 0
    %v607 = vcvt.s32.f32 %v605
    %v608 = vcvt.s32.f32 %v606
    %v610 = vsel %vm359, %v602, 0
    %612 = vmatprep.subr.mxu0 0.0
    %613 = vmatpush1.msra.mxu0 %v601
    %614 = vmatprep.subr.mxu0 0.0
    %615 = vmatpush1.msra.mxu0 %v610
    %616 = vmatprep.subr.mxu0 0.0
    %617 = vmatpush1.msra.mxu0 0.0
    %618 = vmatprep.subr.mxu0 0.0
    %619 = vmatpush1.msra.mxu0 0.0
    %620 = vmatprep.subr.mxu0 0.0
    %621 = vmatpush1.msra.mxu0 0.0
    %622 = vmatprep.subr.mxu0 0.0
    %623 = vmatpush1.msra.mxu0 0.0
    %624 = vmatprep.subr.mxu0 0.0
    %625 = vmatpush1.msra.mxu0 0.0
    %626 = vmatprep.subr.mxu0 0.0
    %627 = vmatpush1.msra.mxu0 0.0
    %628 = vmatprep.subr.mxu0 0.0
    %629 = vmatpush1.msra.mxu0 0.0
    %630 = vmatprep.subr.mxu0 0.0
    %631 = vmatpush1.msra.mxu0 0.0
    %632 = vmatprep.subr.mxu0 0.0
    %633 = vmatpush1.msra.mxu0 0.0
    %634 = vmatprep.subr.mxu0 0.0
    %635 = vmatpush1.msra.mxu0 0.0
    %636 = vmatprep.subr.mxu0 0.0
    %637 = vmatpush1.msra.mxu0 0.0
    %638 = vmatprep.subr.mxu0 0.0
    %639 = vmatpush1.msra.mxu0 0.0
    %640 = vmatprep.subr.mxu0 0.0
    %641 = vmatpush1.msra.mxu0 0.0
    %642 = vmatprep.subr.mxu0 0.0
    %643 = vmatpush1.msra.mxu0 0.0
    %644 = vmatprep.subr.mxu0 0.0
    %645 = vmatpush1.msra.mxu0 0.0
    %646 = vmatprep.subr.mxu0 0.0
    %647 = vmatpush1.msra.mxu0 0.0
    %648 = vmatprep.subr.mxu0 0.0
    %649 = vmatpush1.msra.mxu0 0.0
    %650 = vmatprep.subr.mxu0 0.0
    %651 = vmatpush1.msra.mxu0 0.0
    %652 = vmatprep.subr.mxu0 0.0
    %653 = vmatpush1.msra.mxu0 0.0
    %654 = vmatprep.subr.mxu0 0.0
    %655 = vmatpush1.msra.mxu0 0.0
    %656 = vmatprep.subr.mxu0 0.0
    %657 = vmatpush1.msra.mxu0 0.0
    %658 = vmatprep.subr.mxu0 0.0
    %659 = vmatpush1.msra.mxu0 0.0
    %660 = vmatprep.subr.mxu0 0.0
    %661 = vmatpush1.msra.mxu0 0.0
    %662 = vmatprep.subr.mxu0 0.0
    %663 = vmatpush1.msra.mxu0 0.0
    %664 = vmatprep.subr.mxu0 0.0
    %665 = vmatpush1.msra.mxu0 0.0
    %666 = vmatprep.subr.mxu0 0.0
    %667 = vmatpush1.msra.mxu0 0.0
    %668 = vmatprep.subr.mxu0 0.0
    %669 = vmatpush1.msra.mxu0 0.0
    %670 = vmatprep.subr.mxu0 0.0
    %671 = vmatpush1.msra.mxu0 0.0
    %672 = vmatprep.subr.mxu0 0.0
    %673 = vmatpush1.msra.mxu0 0.0
    %674 = vmatprep.subr.mxu0 0.0
    %675 = vmatpush1.msra.mxu0 0.0
    %676 = vmatprep.mubr.f32.mxu0 0.0
    %677 = vmatmul.mubr.f32.gmra.mrb[0].mxu0 %v357
    %v678 = vpop.f32.mrb[0].mxu0
    %v679 = vadd.f32 0.0, %v678
    %v680 = vpop.f32.mrb[0].mxu0
    %681 = vdwg.mxu0
    %v683 = vsel %vm359, %v608, 0
    %685 = vmatprep.subr.mxu0 0.0
    %686 = vmatpush1.msra.mxu0 %v607
    %687 = vmatprep.subr.mxu0 0.0
    %688 = vmatpush1.msra.mxu0 %v683
    %689 = vmatprep.subr.mxu0 0.0
    %690 = vmatpush1.msra.mxu0 0.0
    %691 = vmatprep.subr.mxu0 0.0
    %692 = vmatpush1.msra.mxu0 0.0
    %693 = vmatprep.subr.mxu0 0.0
    %694 = vmatpush1.msra.mxu0 0.0
    %695 = vmatprep.subr.mxu0 0.0
    %696 = vmatpush1.msra.mxu0 0.0
    %697 = vmatprep.subr.mxu0 0.0
    %698 = vmatpush1.msra.mxu0 0.0
    %699 = vmatprep.subr.mxu0 0.0
    %700 = vmatpush1.msra.mxu0 0.0
    %701 = vmatprep.subr.mxu0 0.0
    %702 = vmatpush1.msra.mxu0 0.0
    %703 = vmatprep.subr.mxu0 0.0
    %704 = vmatpush1.msra.mxu0 0.0
    %705 = vmatprep.subr.mxu0 0.0
    %706 = vmatpush1.msra.mxu0 0.0
    %707 = vmatprep.subr.mxu0 0.0
    %708 = vmatpush1.msra.mxu0 0.0
    %709 = vmatprep.subr.mxu0 0.0
    %710 = vmatpush1.msra.mxu0 0.0
    %711 = vmatprep.subr.mxu0 0.0
    %712 = vmatpush1.msra.mxu0 0.0
    %713 = vmatprep.subr.mxu0 0.0
    %714 = vmatpush1.msra.mxu0 0.0
    %715 = vmatprep.subr.mxu0 0.0
    %716 = vmatpush1.msra.mxu0 0.0
    %717 = vmatprep.subr.mxu0 0.0
    %718 = vmatpush1.msra.mxu0 0.0
    %719 = vmatprep.subr.mxu0 0.0
    %720 = vmatpush1.msra.mxu0 0.0
    %721 = vmatprep.subr.mxu0 0.0
    %722 = vmatpush1.msra.mxu0 0.0
    %723 = vmatprep.subr.mxu0 0.0
    %724 = vmatpush1.msra.mxu0 0.0
    %725 = vmatprep.subr.mxu0 0.0
    %726 = vmatpush1.msra.mxu0 0.0
    %727 = vmatprep.subr.mxu0 0.0
    %728 = vmatpush1.msra.mxu0 0.0
    %729 = vmatprep.subr.mxu0 0.0
    %730 = vmatpush1.msra.mxu0 0.0
    %731 = vmatprep.subr.mxu0 0.0
    %732 = vmatpush1.msra.mxu0 0.0
    %733 = vmatprep.subr.mxu0 0.0
    %734 = vmatpush1.msra.mxu0 0.0
    %735 = vmatprep.subr.mxu0 0.0
    %736 = vmatpush1.msra.mxu0 0.0
    %737 = vmatprep.subr.mxu0 0.0
    %738 = vmatpush1.msra.mxu0 0.0
    %739 = vmatprep.subr.mxu0 0.0
    %740 = vmatpush1.msra.mxu0 0.0
    %741 = vmatprep.subr.mxu0 0.0
    %742 = vmatpush1.msra.mxu0 0.0
    %743 = vmatprep.subr.mxu0 0.0
    %744 = vmatpush1.msra.mxu0 0.0
    %745 = vmatprep.subr.mxu0 0.0
    %746 = vmatpush1.msra.mxu0 0.0
    %747 = vmatprep.subr.mxu0 0.0
    %748 = vmatpush1.msra.mxu0 0.0
    %749 = vmatprep.mubr.f32.mxu0 0.0
    %750 = vmatmul.mubr.f32.gmra.mrb[0].mxu0 %v357
    %v751 = vpop.f32.mrb[0].mxu0
    %v752 = vadd.f32 0.0, %v751
    %v753 = vpop.f32.mrb[0].mxu0
    %754 = vdwg.mxu0
    %vm755 = vcmp.le.f32.partialorder %v679, 4.0
    %v756 = vadd.f32 %v679, %v752
    %vm757 = vcmp.gt.f32.partialorder %v756, 4.0
    %vm758 = vmand %vm755, %vm757
    %v759 = vsel %vm758, %v569, -1.0
    %v760 = vsel %vm511, %v759, -inf
    %761 = vmax.xlane.f32.xlu0 %v760
    %v762 = vpop.xlane.xlu0 %761
    %v763 = vadd.f32 %v762, 1e-06
    %v764 = vlaneseq
    %v765 = vshrl.u32 %v764, 7
    %v766 = vsub.s32 0, %v765
    %v767 = vrot.slane %v763, %v766
    %v768 = vrcp.pop %v767
    %v769 = vmul.f32 %v288, %v768
    %v770 = vmul.f32 %v293, %v768
    %vm771 = vcmp.lt.f32.partialorder %v769, %v523
    %vm772 = vcmp.lt.f32.partialorder %v770, %v523
    %v773 = vsel %vm771, 1, 0
    %v774 = vsel %vm772, 1, 0
    %v775 = vcvt.s32.f32 %v773
    %v776 = vcvt.s32.f32 %v774
    %v777 = vld [vmem:[%s6 + $0x1] sm:$0x1]
    %779 = vset.pattern.permute.xlu0 1
    %780 = vperm.xlu0 %779, %v775
    %v781 = vpop.permute.xlu0 %780
    %784 = vset.pattern.permute.xlu0 1
    %785 = vperm.xlu0 %784, %v776
    %v786 = vpop.permute.xlu0 %785
    %v788 = vlaneseq
    %v789 = vshrl.u32 %v788, 7
    %v790 = vsub.s32 0, %v789
    %v791 = vrot.slane %v777, %v790
    %v792 = vmul.f32 %v781, %v791
    %v793 = vmul.f32 %v786, %v791
    %v794 = vadd.f32 %v545, %v792
    %v795 = vadd.f32 %v546, %v793
    %v796 = vld [vmem:[%s4] sm:$0xf]
    %v797 = vlaneseq
    %v798 = vshrl.u32 %v797, 7
    %v799 = vsub.s32 0, %v798
    %v800 = vrot.slane %v796, %v799
    %v801 = vmul.f32 %v111, %v800
    %v802 = vmul.f32 %v116, %v800
    %v803 = vlaneseq
    %v804 = vshrl.u32 %v803, 7
    %v805 = vsub.s32 1, %v804
    %v806 = vrot.slane %v796, %v805
    %v807 = vmul.f32 %v192, %v806
    %v808 = vmul.f32 %v197, %v806
    %v809 = vsub.f32 %v801, %v807
    %v810 = vsub.f32 %v802, %v808
    %v811 = vlaneseq
    %v812 = vshrl.u32 %v811, 7
    %v813 = vsub.s32 2, %v812
    %v814 = vrot.slane %v796, %v813
    %v815 = vmul.f32 %v111, %v814
    %v816 = vmul.f32 %v116, %v814
    %v817 = vlaneseq
    %v818 = vshrl.u32 %v817, 7
    %v819 = vsub.s32 3, %v818
    %v820 = vrot.slane %v796, %v819
    %v821 = vmul.f32 %v192, %v820
    %v822 = vmul.f32 %v197, %v820
    %v823 = vsub.f32 %v815, %v821
    %v824 = vsub.f32 %v816, %v822
    %v825 = vmul.f32 %v794, %v823
    %v826 = vmul.f32 %v795, %v824
    %v827 = vadd.f32 %v809, %v825
    %v828 = vadd.f32 %v810, %v826
    %v829 = vmul.f32 %v111, %v806
    %v830 = vmul.f32 %v116, %v806
    %v831 = vmul.f32 %v192, %v800
    %v832 = vmul.f32 %v197, %v800
    %v833 = vadd.f32 %v829, %v831
    %v834 = vadd.f32 %v830, %v832
    %v835 = vmul.f32 %v111, %v820
    %v836 = vmul.f32 %v116, %v820
    %v837 = vmul.f32 %v192, %v814
    %v838 = vmul.f32 %v197, %v814
    %v839 = vadd.f32 %v835, %v837
    %v840 = vadd.f32 %v836, %v838
    %v841 = vmul.f32 %v794, %v839
    %v842 = vmul.f32 %v795, %v840
    %v843 = vadd.f32 %v833, %v841
    %v844 = vadd.f32 %v834, %v842
    %v845 = vld [vmem:[%s3] sm:$0xff]
    %v846 = vld [vmem:[%s3 + $0x8] sm:$0x1]
    %848 = vset.pattern.permute.xlu0 0
    %849 = vperm.xlu0 %848, %v845
    %v850 = vpop.permute.xlu0 %849
    %853 = vset.pattern.permute.xlu0 0
    %854 = vperm.xlu0 %853, %v846
    %v855 = vpop.permute.xlu0 %854
    %v857 = vmul.f32 %v827, %v850
    %v858 = vmul.f32 %v828, %v855
    %v859 = vmul.f32 %v843, %v850
    %v860 = vmul.f32 %v844, %v855
    %861 = vxpose.xlu0.b32.start [1/16] %v33, 128
    %862 = vxpose.xlu0.b32.cont [2/16] %v34, 128
    %863 = vxpose.xlu0.b32.cont [3/16] 0.0, 128
    %864 = vxpose.xlu0.b32.cont [4/16] 0.0, 128
    %865 = vxpose.xlu0.b32.cont [5/16] 0.0, 128
    %866 = vxpose.xlu0.b32.cont [6/16] 0.0, 128
    %867 = vxpose.xlu0.b32.cont [7/16] 0.0, 128
    %868 = vxpose.xlu0.b32.cont [8/16] 0.0, 128
    %869 = vxpose.xlu0.b32.cont [9/16] 0.0, 128
    %870 = vxpose.xlu0.b32.cont [10/16] 0.0, 128
    %871 = vxpose.xlu0.b32.cont [11/16] 0.0, 128
    %872 = vxpose.xlu0.b32.cont [12/16] 0.0, 128
    %873 = vxpose.xlu0.b32.cont [13/16] 0.0, 128
    %874 = vxpose.xlu0.b32.cont [14/16] 0.0, 128
    %875 = vxpose.xlu0.b32.cont [15/16] 0.0, 128
    %876 = vxpose.xlu0.b32.end [16/16] 0.0, 128
    %v877 = vpop.trf.xlu0
    %v878 = vpop.trf.xlu0
    %v879 = vpop.trf.xlu0
    %v880 = vpop.trf.xlu0
    %v881 = vpop.trf.xlu0
    %v882 = vpop.trf.xlu0
    %v883 = vpop.trf.xlu0
    %v884 = vpop.trf.xlu0
    %v885 = vpop.trf.xlu0
    %v886 = vpop.trf.xlu0
    %v887 = vpop.trf.xlu0
    %v888 = vpop.trf.xlu0
    %v889 = vpop.trf.xlu0
    %v890 = vpop.trf.xlu0
    %v891 = vpop.trf.xlu0
    %v892 = vpop.trf.xlu0
    %893 = vxpose.xlu0.b32.start [1/16] %v35, 128
    %894 = vxpose.xlu0.b32.cont [2/16] %v36, 128
    %895 = vxpose.xlu0.b32.cont [3/16] 0.0, 128
    %896 = vxpose.xlu0.b32.cont [4/16] 0.0, 128
    %897 = vxpose.xlu0.b32.cont [5/16] 0.0, 128
    %898 = vxpose.xlu0.b32.cont [6/16] 0.0, 128
    %899 = vxpose.xlu0.b32.cont [7/16] 0.0, 128
    %900 = vxpose.xlu0.b32.cont [8/16] 0.0, 128
    %901 = vxpose.xlu0.b32.cont [9/16] 0.0, 128
    %902 = vxpose.xlu0.b32.cont [10/16] 0.0, 128
    %903 = vxpose.xlu0.b32.cont [11/16] 0.0, 128
    %904 = vxpose.xlu0.b32.cont [12/16] 0.0, 128
    %905 = vxpose.xlu0.b32.cont [13/16] 0.0, 128
    %906 = vxpose.xlu0.b32.cont [14/16] 0.0, 128
    %907 = vxpose.xlu0.b32.cont [15/16] 0.0, 128
    %908 = vxpose.xlu0.b32.end [16/16] 0.0, 128
    %v909 = vpop.trf.xlu0
    %v910 = vpop.trf.xlu0
    %v911 = vpop.trf.xlu0
    %v912 = vpop.trf.xlu0
    %v913 = vpop.trf.xlu0
    %v914 = vpop.trf.xlu0
    %v915 = vpop.trf.xlu0
    %v916 = vpop.trf.xlu0
    %v917 = vpop.trf.xlu0
    %v918 = vpop.trf.xlu0
    %v919 = vpop.trf.xlu0
    %v920 = vpop.trf.xlu0
    %v921 = vpop.trf.xlu0
    %v922 = vpop.trf.xlu0
    %v923 = vpop.trf.xlu0
    %v924 = vpop.trf.xlu0
    %v926 = vsel %vm355, %v909, 0
    %v929 = vsel %vm355, %v910, 0
    %v932 = vsel %vm359, %v860, 0
    %934 = vmatprep.subr.mxu0 0.0
    %935 = vmatpush1.msra.mxu0 %v859
    %936 = vmatprep.subr.mxu0 0.0
    %937 = vmatpush1.msra.mxu0 %v932
    %938 = vmatprep.subr.mxu0 0.0
    %939 = vmatpush1.msra.mxu0 0.0
    %940 = vmatprep.subr.mxu0 0.0
    %941 = vmatpush1.msra.mxu0 0.0
    %942 = vmatprep.subr.mxu0 0.0
    %943 = vmatpush1.msra.mxu0 0.0
    %944 = vmatprep.subr.mxu0 0.0
    %945 = vmatpush1.msra.mxu0 0.0
    %946 = vmatprep.subr.mxu0 0.0
    %947 = vmatpush1.msra.mxu0 0.0
    %948 = vmatprep.subr.mxu0 0.0
    %949 = vmatpush1.msra.mxu0 0.0
    %950 = vmatprep.subr.mxu0 0.0
    %951 = vmatpush1.msra.mxu0 0.0
    %952 = vmatprep.subr.mxu0 0.0
    %953 = vmatpush1.msra.mxu0 0.0
    %954 = vmatprep.subr.mxu0 0.0
    %955 = vmatpush1.msra.mxu0 0.0
    %956 = vmatprep.subr.mxu0 0.0
    %957 = vmatpush1.msra.mxu0 0.0
    %958 = vmatprep.subr.mxu0 0.0
    %959 = vmatpush1.msra.mxu0 0.0
    %960 = vmatprep.subr.mxu0 0.0
    %961 = vmatpush1.msra.mxu0 0.0
    %962 = vmatprep.subr.mxu0 0.0
    %963 = vmatpush1.msra.mxu0 0.0
    %964 = vmatprep.subr.mxu0 0.0
    %965 = vmatpush1.msra.mxu0 0.0
    %966 = vmatprep.subr.mxu0 0.0
    %967 = vmatpush1.msra.mxu0 0.0
    %968 = vmatprep.subr.mxu0 0.0
    %969 = vmatpush1.msra.mxu0 0.0
    %970 = vmatprep.subr.mxu0 0.0
    %971 = vmatpush1.msra.mxu0 0.0
    %972 = vmatprep.subr.mxu0 0.0
    %973 = vmatpush1.msra.mxu0 0.0
    %974 = vmatprep.subr.mxu0 0.0
    %975 = vmatpush1.msra.mxu0 0.0
    %976 = vmatprep.subr.mxu0 0.0
    %977 = vmatpush1.msra.mxu0 0.0
    %978 = vmatprep.subr.mxu0 0.0
    %979 = vmatpush1.msra.mxu0 0.0
    %980 = vmatprep.subr.mxu0 0.0
    %981 = vmatpush1.msra.mxu0 0.0
    %982 = vmatprep.subr.mxu0 0.0
    %983 = vmatpush1.msra.mxu0 0.0
    %984 = vmatprep.subr.mxu0 0.0
    %985 = vmatpush1.msra.mxu0 0.0
    %986 = vmatprep.subr.mxu0 0.0
    %987 = vmatpush1.msra.mxu0 0.0
    %988 = vmatprep.subr.mxu0 0.0
    %989 = vmatpush1.msra.mxu0 0.0
    %990 = vmatprep.subr.mxu0 0.0
    %991 = vmatpush1.msra.mxu0 0.0
    %992 = vmatprep.subr.mxu0 0.0
    %993 = vmatpush1.msra.mxu0 0.0
    %994 = vmatprep.subr.mxu0 0.0
    %995 = vmatpush1.msra.mxu0 0.0
    %996 = vmatprep.subr.mxu0 0.0
    %997 = vmatpush1.msra.mxu0 0.0
    %998 = vmatprep.mubr.f32.mxu0 0.0
    %999 = vmatmul.mubr.f32.gmra.mrb[0].mxu0 %v926
    %v1000 = vpop.f32.mrb[0].mxu0
    %v1001 = vadd.f32 0.0, %v1000
    %v1002 = vpop.f32.mrb[0].mxu0
    %1003 = vmatprep.mubr.f32.mxu0 0.0
    %1004 = vmatmul.mubr.f32.gmra.mrb[0].mxu0 %v929
    %v1005 = vpop.f32.mrb[0].mxu0
    %v1006 = vadd.f32 0.0, %v1005
    %v1007 = vpop.f32.mrb[0].mxu0
    %1008 = vdwg.mxu0
    %v1010 = vsel %vm355, %v877, 0
    %v1013 = vsel %vm355, %v878, 0
    %v1016 = vsel %vm359, %v858, 0
    %1018 = vmatprep.subr.mxu0 0.0
    %1019 = vmatpush1.msra.mxu0 %v857
    %1020 = vmatprep.subr.mxu0 0.0
    %1021 = vmatpush1.msra.mxu0 %v1016
    %1022 = vmatprep.subr.mxu0 0.0
    %1023 = vmatpush1.msra.mxu0 0.0
    %1024 = vmatprep.subr.mxu0 0.0
    %1025 = vmatpush1.msra.mxu0 0.0
    %1026 = vmatprep.subr.mxu0 0.0
    %1027 = vmatpush1.msra.mxu0 0.0
    %1028 = vmatprep.subr.mxu0 0.0
    %1029 = vmatpush1.msra.mxu0 0.0
    %1030 = vmatprep.subr.mxu0 0.0
    %1031 = vmatpush1.msra.mxu0 0.0
    %1032 = vmatprep.subr.mxu0 0.0
    %1033 = vmatpush1.msra.mxu0 0.0
    %1034 = vmatprep.subr.mxu0 0.0
    %1035 = vmatpush1.msra.mxu0 0.0
    %1036 = vmatprep.subr.mxu0 0.0
    %1037 = vmatpush1.msra.mxu0 0.0
    %1038 = vmatprep.subr.mxu0 0.0
    %1039 = vmatpush1.msra.mxu0 0.0
    %1040 = vmatprep.subr.mxu0 0.0
    %1041 = vmatpush1.msra.mxu0 0.0
    %1042 = vmatprep.subr.mxu0 0.0
    %1043 = vmatpush1.msra.mxu0 0.0
    %1044 = vmatprep.subr.mxu0 0.0
    %1045 = vmatpush1.msra.mxu0 0.0
    %1046 = vmatprep.subr.mxu0 0.0
    %1047 = vmatpush1.msra.mxu0 0.0
    %1048 = vmatprep.subr.mxu0 0.0
    %1049 = vmatpush1.msra.mxu0 0.0
    %1050 = vmatprep.subr.mxu0 0.0
    %1051 = vmatpush1.msra.mxu0 0.0
    %1052 = vmatprep.subr.mxu0 0.0
    %1053 = vmatpush1.msra.mxu0 0.0
    %1054 = vmatprep.subr.mxu0 0.0
    %1055 = vmatpush1.msra.mxu0 0.0
    %1056 = vmatprep.subr.mxu0 0.0
    %1057 = vmatpush1.msra.mxu0 0.0
    %1058 = vmatprep.subr.mxu0 0.0
    %1059 = vmatpush1.msra.mxu0 0.0
    %1060 = vmatprep.subr.mxu0 0.0
    %1061 = vmatpush1.msra.mxu0 0.0
    %1062 = vmatprep.subr.mxu0 0.0
    %1063 = vmatpush1.msra.mxu0 0.0
    %1064 = vmatprep.subr.mxu0 0.0
    %1065 = vmatpush1.msra.mxu0 0.0
    %1066 = vmatprep.subr.mxu0 0.0
    %1067 = vmatpush1.msra.mxu0 0.0
    %1068 = vmatprep.subr.mxu0 0.0
    %1069 = vmatpush1.msra.mxu0 0.0
    %1070 = vmatprep.subr.mxu0 0.0
    %1071 = vmatpush1.msra.mxu0 0.0
    %1072 = vmatprep.subr.mxu0 0.0
    %1073 = vmatpush1.msra.mxu0 0.0
    %1074 = vmatprep.subr.mxu0 0.0
    %1075 = vmatpush1.msra.mxu0 0.0
    %1076 = vmatprep.subr.mxu0 0.0
    %1077 = vmatpush1.msra.mxu0 0.0
    %1078 = vmatprep.subr.mxu0 0.0
    %1079 = vmatpush1.msra.mxu0 0.0
    %1080 = vmatprep.subr.mxu0 0.0
    %1081 = vmatpush1.msra.mxu0 0.0
    %1082 = vmatprep.mubr.f32.mxu0 0.0
    %1083 = vmatmul.mubr.f32.gmra.mrb[0].mxu0 %v1010
    %v1084 = vpop.f32.mrb[0].mxu0
    %v1085 = vadd.f32 %v1001, %v1084
    %v1086 = vpop.f32.mrb[0].mxu0
    %1087 = vmatprep.mubr.f32.mxu0 0.0
    %1088 = vmatmul.mubr.f32.gmra.mrb[0].mxu0 %v1013
    %v1089 = vpop.f32.mrb[0].mxu0
    %v1090 = vadd.f32 %v1006, %v1089
    %v1091 = vpop.f32.mrb[0].mxu0
    %1092 = vdwg.mxu0
    %1093 = vst.msk [vmem:[#allocation3] sm:$0xff] %vm214, %v1085
    %1094 = vst.msk [vmem:[#allocation3 + $0x8] sm:$0xff] %vm214, %v1090
    // Predicated region
    $region34: #{tpu_custom_call.1} parent=1 // pred_check
      _
    $region35: #{tpu_custom_call.1} parent=1 // pred_check_branch
      %1096 = sbr.rel (0) target = $region37
    $region36: #{tpu_custom_call.1} parent=1 // pred_region
      %s1098 = ssub.s32 256, 256
      %1099 = vsyncadd [#allocation4], %s1098
      %s1100 = sshll.u32 [#allocation3], 4
      %s1101 = int_to_ptr.vmem [resolvable:$true] %s1100
      %1106 = dma.vmem_to_hbm [thread:$0]  %s1101, 256, %s8, [#allocation4], 128, 128, 8
    $region37: #{tpu_custom_call.1} parent=1 // pred_fallthru
      _
    // Predicated region
    $region38: #{tpu_custom_call.1} parent=1 // pred_check
      _
    $region39: #{tpu_custom_call.1} parent=1 // pred_check_branch
      %1108 = sbr.rel (0) target = $region41
    $region40: #{tpu_custom_call.1} parent=1 // pred_region
      %1109 = dma.done [#allocation4], 256
    $region41: #{tpu_custom_call.1} parent=1 // pred_fallthru
      _
    %1110 = vsyncpa [#allocation4], 1

</llo_original>
